<compile_context>
chip_gen: v5e
topology: v5e:2x2
jax: 0.10.0
libtpu: 0.0.40
codegen_flags: <defaults>
</compile_context>

<pallas_src>
import math

import jax
import jax.numpy as jnp
from jax.experimental import pallas as pl
from jax.experimental.pallas import tpu as pltpu


def _add_kernel(a_ref, b_ref, o_ref):
    # Hot path: VPU elementwise add on the current VMEM tile.
    o_ref[...] = a_ref[...] + b_ref[...]


_SMALL_ELEMS = 128 * 1024                    # <= this -> single-block path
_LANE = 128
_COL_CANDIDATES = (8192, 4096, 2048, 1024, 512, 256, 128)


def _round_up(x, m):
    return -(-x // m) * m


def _round_down(x, m):
    return (x // m) * m


def _vmem_bytes():
    """Best-effort physical VMEM query; conservative fallback (v7x per-TC)."""
    try:
        info = pltpu.get_tpu_info()
        for attr in ("vmem_capacity_bytes", "vmem_bytes", "vmem_size_bytes"):
            v = getattr(info, attr, None)
            if isinstance(v, int) and v > 0:
                return v
    except Exception:
        pass
    return 64 * 1024 * 1024


def _gen_params():
    """(target bytes per stream per block, vmem_limit_bytes) per generation."""
    vmem = _vmem_bytes()
    if vmem >= 96 * 1024 * 1024:             # v5e / v6e: 128 MiB physical VMEM
        return 8 * 1024 * 1024, 64 * 1024 * 1024
    return 6 * 1024 * 1024, 48 * 1024 * 1024  # v7x: 64 MiB per TensorCore


def _add_single_block(a2: jax.Array, b2: jax.Array) -> jax.Array:
    """Whole (small) array as one VMEM block; no grid, no pipeline overhead."""
    _, vmem_limit = _gen_params()
    return pl.pallas_call(
        _add_kernel,
        out_shape=jax.ShapeDtypeStruct(a2.shape, a2.dtype),
        compiler_params=pltpu.CompilerParams(vmem_limit_bytes=vmem_limit),
    )(a2, b2)


def _add_tiled_rows(a2: jax.Array, b2: jax.Array) -> jax.Array:
    """Lane-dense (rows, cols) slab; 1-D parallel grid over row blocks."""
    rows, cols = a2.shape
    itemsize = a2.dtype.itemsize
    target_bytes, vmem_limit = _gen_params()

    # Dtype-aware block: ~6-8 MiB per stream, multiple of 8 sublanes.
    tile_rows = max(8, _round_down(max(1, target_bytes // (cols * itemsize)), 8))
    # Guarantee >= 2 grid steps so both v7x TensorCores get work.
    tile_rows = min(tile_rows, max(8, _round_up(pl.cdiv(rows, 2), 8)))

    grid = (pl.cdiv(rows, tile_rows),)       # ragged final block is masked
    spec = pl.BlockSpec((tile_rows, cols), lambda i: (i, 0))
    n = rows * cols
    return pl.pallas_call(
        _add_kernel,
        out_shape=jax.ShapeDtypeStruct((rows, cols), a2.dtype),
        grid_spec=pltpu.PrefetchScalarGridSpec(
            num_scalar_prefetch=0,
            grid=grid,
            in_specs=[spec, spec],
            out_specs=spec,
        ),
        compiler_params=pltpu.CompilerParams(
            dimension_semantics=("parallel",),
            vmem_limit_bytes=vmem_limit,
        ),
        cost_estimate=pl.CostEstimate(
            flops=n, transcendentals=0, bytes_accessed=3 * n * itemsize),
    )(a2, b2)


def _add_tiled_2d(a2: jax.Array, b2: jax.Array) -> jax.Array:
    """Fallback for large inputs whose element count is not a multiple of 128:
    tile the collapsed (lead, last_dim) layout directly; ragged final blocks
    (rows and/or lanes) are masked by Pallas -> no padding, no post-slice."""
    rows, cols = a2.shape
    itemsize = a2.dtype.itemsize
    target_bytes, vmem_limit = _gen_params()

    if cols <= 2048:
        bc = cols                            # full last dim (any value is legal)
    else:
        bc = max(128, min(2048, _round_down(cols, 128)))

    br = max(8, _round_down(max(1, target_bytes // (bc * itemsize)), 8))
    if rows <= 8:
        br = rows                            # full dim (legal even if < 8)
    else:
        br = min(br, max(8, _round_up(pl.cdiv(rows, 2), 8)))

    grid = (pl.cdiv(rows, br), pl.cdiv(cols, bc))
    spec = pl.BlockSpec((br, bc), lambda i, j: (i, j))
    n = rows * cols
    return pl.pallas_call(
        _add_kernel,
        out_shape=jax.ShapeDtypeStruct((rows, cols), a2.dtype),
        grid_spec=pltpu.PrefetchScalarGridSpec(
            num_scalar_prefetch=0,
            grid=grid,
            in_specs=[spec, spec],
            out_specs=spec,
        ),
        compiler_params=pltpu.CompilerParams(
            dimension_semantics=("parallel", "parallel"),
            vmem_limit_bytes=vmem_limit,
        ),
        cost_estimate=pl.CostEstimate(
            flops=n, transcendentals=0, bytes_accessed=3 * n * itemsize),
    )(a2, b2)


def pallas_sum(a: jax.Array, b: jax.Array) -> jax.Array:
    """SumModule.forward: elementwise a + b (with broadcasting / promotion)."""
    a = jnp.asarray(a)
    b = jnp.asarray(b)

    out_shape = jnp.broadcast_shapes(a.shape, b.shape)
    out_dtype = jnp.promote_types(a.dtype, b.dtype)
    if a.dtype != out_dtype:
        a = a.astype(out_dtype)
    if b.dtype != out_dtype:
        b = b.astype(out_dtype)
    if a.shape != out_shape:
        a = jnp.broadcast_to(a, out_shape)
    if b.shape != out_shape:
        b = jnp.broadcast_to(b, out_shape)

    n = math.prod(out_shape) if out_shape else 1
    if n == 0:
        return jnp.zeros(out_shape, out_dtype)

    # Small inputs: single full-array block, presented lane-dense.
    if n <= _SMALL_ELEMS:
        if n % _LANE == 0:
            a2 = a.reshape(n // _LANE, _LANE)
            b2 = b.reshape(n // _LANE, _LANE)
        else:
            a2 = a.reshape(1, n)
            b2 = b.reshape(1, n)
        return _add_single_block(a2, b2).reshape(out_shape)

    # Large inputs: pad-free lane-dense reshape when possible.
    if n % _LANE == 0:
        cols = next(c for c in _COL_CANDIDATES if n % c == 0)
        out2 = _add_tiled_rows(a.reshape(n // cols, cols),
                               b.reshape(n // cols, cols))
        return out2.reshape(out_shape)

    # Rare: large and not 128-divisible.  Tile the original layout directly
    # (collapse leading dims); ragged final blocks are masked.
    lead = n // out_shape[-1]
    out2 = _add_tiled_2d(a.reshape(lead, out_shape[-1]),
                         b.reshape(lead, out_shape[-1]))
    return out2.reshape(out_shape)


if __name__ == "__main__":
    key = jax.random.PRNGKey(0)
    k0, k1, k2, k3, k4, k5 = jax.random.split(key, 6)

    # Primary demo: small NCHW-like tensors (single lane-dense block path).
    shape_small = (2, 4, 16, 16)
    x0 = jax.random.normal(k0, shape_small, dtype=jnp.float32)
    x1 = jax.random.normal(k1, shape_small, dtype=jnp.float32)
    out_small = jax.block_until_ready(pallas_sum(x0, x1))
    assert out_small.shape == shape_small and out_small.dtype == jnp.float32
    assert jnp.allclose(out_small, x0 + x1), "Pallas sum mismatch (small path)"

    # Lane-dense tiled path (256*1536 = 48*8192 -> no padding, >=2 grid steps).
    shape_mid = (256, 1536)
    y0 = jax.random.normal(k2, shape_mid, dtype=jnp.float32)
    y1 = jax.random.normal(k3, shape_mid, dtype=jnp.float32)
    out_mid = jax.block_until_ready(pallas_sum(y0, y1))
    assert out_mid.shape == shape_mid
    assert jnp.allclose(out_mid, y0 + y1), "Pallas sum mismatch (tiled path)"

    # Ragged fallback path (135*1001 elements, not a multiple of 128).
    shape_ragged = (135, 1001)
    z0 = jax.random.normal(k4, shape_ragged, dtype=jnp.float32)
    z1 = jax.random.normal(k5, shape_ragged, dtype=jnp.float32)
    out_rag = jax.block_until_ready(pallas_sum(z0, z1))
    assert out_rag.shape == shape_ragged
    assert jnp.allclose(out_rag, z0 + z1), "Pallas sum mismatch (ragged path)"

    print("KERNEL_OK")
</pallas_src>

<mosaic_0001>
module attributes {stable_mosaic.version = 11 : i64} {
  func.func @_add_kernel(%arg0: memref<16x128xf32, #tpu.memory_space<vmem>>, %arg1: memref<16x128xf32, #tpu.memory_space<vmem>>, %arg2: memref<16x128xf32, #tpu.memory_space<vmem>>) attributes {dimension_semantics = [], scalar_prefetch = 0 : i64, scratch_operands = 0 : i64, tpu.core_type = #tpu.core_type<tc>} {
    %c0 = arith.constant 0 : index
    %c0_0 = arith.constant 0 : index
    %0 = vector.load %arg0[%c0, %c0_0] : memref<16x128xf32, #tpu.memory_space<vmem>>, vector<16x128xf32>
    %c0_1 = arith.constant 0 : index
    %c0_2 = arith.constant 0 : index
    %1 = vector.load %arg1[%c0_1, %c0_2] : memref<16x128xf32, #tpu.memory_space<vmem>>, vector<16x128xf32>
    %2 = arith.addf %0, %1 : vector<16x128xf32>
    %c0_3 = arith.constant 0 : index
    %c0_4 = arith.constant 0 : index
    %3 = vector.load %arg2[%c0_3, %c0_4] : memref<16x128xf32, #tpu.memory_space<vmem>>, vector<16x128xf32>
    tpu.vector_store %arg2[%c0_3, %c0_4], %2 {strides = array<i32>} : memref<16x128xf32, #tpu.memory_space<vmem>>, vector<16x128xf32>,
    return
  }
}

</mosaic_0001>

<llo_original>
// kernel: tpu_custom_call.1
$region0: #{tpu_custom_call.1}
  #allocation0 [shape = 'u32[]', space=smem, size = 0x4, offset = 0x4, fixed_abs, tag = 'smem constant byte address 0x4 - core index']
  #allocation1 [shape = 'u32[72,128]{1,0:T(1,128)}', space=vmem, size = 0x9000, scoped, tag = 'internal scratch']
  %s0 = inlined_call_operand.hbm [shape: f32[16,128], index: 0, kind: input, shape index: {}]
  %s1 = inlined_call_operand.hbm [shape: f32[16,128], index: 1, kind: input, shape index: {}]
  %s2 = inlined_call_operand.hbm [shape: f32[16,128], index: 2, kind: output, shape index: {}]
  %s3 = sld [smem:[#allocation0]]
  $region26: #{tpu_custom_call.1} parent=0
    _
  %s5 = ssub.s32 1, %s3
  %s6 = scalar_select 0, %s5, %s3
  $region1: #{tpu_custom_call.1} parent=0
    #allocation2 [shape = 'u8[8192]{0}', space=vmem, size = 0x2000, scoped, tag = 'input window, operand 0, single buffered']
    #allocation3 [shape = 's32[1]{0}', space=sflag, size = 0x4, scoped, tag = 'scoped memory for tpu_custom_call.1']
    #allocation4 [shape = 's32[1]{0}', space=sflag, size = 0x4, scoped, tag = 'scoped memory for tpu_custom_call.1']
    #allocation5 [shape = 'u8[8192]{0}', space=vmem, size = 0x2000, scoped, tag = 'input window, operand 1, single buffered']
    #allocation6 [shape = 's32[1]{0}', space=sflag, size = 0x4, scoped, tag = 'scoped memory for tpu_custom_call.1']
    #allocation7 [shape = 'u8[8192]{0}', space=vmem, size = 0x2000, scoped, tag = 'output window, operand 0, single buffered']
    %7 = vsyncpa [#allocation3], 0
    %8 = vsyncpa [#allocation6], 0
    %9 = vsyncpa [#allocation4], 0
    // Predicated region
    $region2: #{tpu_custom_call.1} parent=1 // pred_check
      _
    $region3: #{tpu_custom_call.1} parent=1 // pred_check_branch
      %11 = sbr.rel (0) target = $region5
    $region4: #{tpu_custom_call.1} parent=1 // pred_region
      %13 = vsyncadd [#allocation3], 0
      %s14 = sshll.u32 %s0, 4
      %s15 = int_to_ptr.hbm [resolvable:$true] %s14
      %s16 = sshll.u32 [#allocation2], 4
      %s17 = int_to_ptr.vmem [resolvable:$true] %s16
      %22 = dma.hbm_to_vmem [thread:$0]  %s15, 256, %s17, [#allocation3], 128, 128, 8
    $region5: #{tpu_custom_call.1} parent=1 // pred_fallthru
      _
    // Predicated region
    $region6: #{tpu_custom_call.1} parent=1 // pred_check
      _
    $region7: #{tpu_custom_call.1} parent=1 // pred_check_branch
      %24 = sbr.rel (0) target = $region9
    $region8: #{tpu_custom_call.1} parent=1 // pred_region
      %26 = vsyncadd [#allocation6], 0
      %s27 = sshll.u32 %s1, 4
      %s28 = int_to_ptr.hbm [resolvable:$true] %s27
      %s29 = sshll.u32 [#allocation5], 4
      %s30 = int_to_ptr.vmem [resolvable:$true] %s29
      %35 = dma.hbm_to_vmem [thread:$0]  %s28, 256, %s30, [#allocation6], 128, 128, 8
    $region9: #{tpu_custom_call.1} parent=1 // pred_fallthru
      _
    // Predicated region
    $region10: #{tpu_custom_call.1} parent=1 // pred_check
      _
    $region11: #{tpu_custom_call.1} parent=1 // pred_check_branch
      %37 = sbr.rel (0) target = $region13
    $region12: #{tpu_custom_call.1} parent=1 // pred_region
      %39 = dma.done [#allocation3], 256
    $region13: #{tpu_custom_call.1} parent=1 // pred_fallthru
      _
    // Predicated region
    $region14: #{tpu_custom_call.1} parent=1 // pred_check
      _
    $region15: #{tpu_custom_call.1} parent=1 // pred_check_branch
      %41 = sbr.rel (0) target = $region17
    $region16: #{tpu_custom_call.1} parent=1 // pred_region
      %43 = dma.done [#allocation6], 256
    $region17: #{tpu_custom_call.1} parent=1 // pred_fallthru
      _
    %v44 = vld [vmem:[#allocation2] sm:$0xff]
    %v45 = vld [vmem:[#allocation2 + $0x8] sm:$0xff]
    %v46 = vld [vmem:[#allocation5] sm:$0xff]
    %v47 = vld [vmem:[#allocation5 + $0x8] sm:$0xff]
    %v48 = vadd.f32 %v44, %v46
    %v49 = vadd.f32 %v45, %v47
    %50 = vst [vmem:[#allocation7] sm:$0xff] %v48
    %51 = vst [vmem:[#allocation7 + $0x8] sm:$0xff] %v49
    // Predicated region
    $region18: #{tpu_custom_call.1} parent=1 // pred_check
      _
    $region19: #{tpu_custom_call.1} parent=1 // pred_check_branch
      %53 = sbr.rel (0) target = $region21
    $region20: #{tpu_custom_call.1} parent=1 // pred_region
      %55 = vsyncadd [#allocation4], 0
      %s56 = sshll.u32 [#allocation7], 4
      %s57 = int_to_ptr.vmem [resolvable:$true] %s56
      %s58 = sshll.u32 %s2, 4
      %s59 = int_to_ptr.hbm [resolvable:$true] %s58
      %64 = dma.vmem_to_hbm [thread:$0]  %s57, 256, %s59, [#allocation4], 128, 128, 8
    $region21: #{tpu_custom_call.1} parent=1 // pred_fallthru
      _
    // Predicated region
    $region22: #{tpu_custom_call.1} parent=1 // pred_check
      _
    $region23: #{tpu_custom_call.1} parent=1 // pred_check_branch
      %66 = sbr.rel (0) target = $region25
    $region24: #{tpu_custom_call.1} parent=1 // pred_region
      %68 = dma.done [#allocation4], 256
    $region25: #{tpu_custom_call.1} parent=1 // pred_fallthru
      _
    %69 = vsyncpa [#allocation3], 1
    %70 = vsyncpa [#allocation6], 1
    %71 = vsyncpa [#allocation4], 1

</llo_original>
